<compile_context>
chip_gen: v7x
topology: tpu7x:2x2x1
jax: 0.10.0
libtpu: 0.0.40
codegen_flags: <defaults>
</compile_context>

<pallas_src>
import functools
import math

import jax
import jax.numpy as jnp
from jax.experimental import pallas as pl
from jax.experimental.pallas import tpu as pltpu

_LANES = 128
_SUBLANES = 8
# Worst-case VMEM bytes allowed per pipeline buffer.  Pallas double-buffers
# both the input and the output block, so total ~4x this, plus the (tiny)
# resident weight — comfortably inside the limit below on all generations.
_TARGET_BUFFER_BYTES = 5 * 1024 * 1024
_VMEM_LIMIT_BYTES = 32 * 1024 * 1024   # <= v6e/v7x defaults, raises v5e's 16 MiB


def _biasfree_ln_kernel(x_ref, w_ref, o_ref):
    """x_ref: (TM, C), w_ref: (1, C), o_ref: (TM, C). Normalize over C (lanes)."""
    x = x_ref[...].astype(jnp.float32)
    mu = jnp.mean(x, axis=-1, keepdims=True)
    xc = x - mu
    var = jnp.mean(xc * xc, axis=-1, keepdims=True)        # unbiased=False
    y = x * jax.lax.rsqrt(var + 1e-5)                      # x, NOT (x - mu)
    y = y * w_ref[...].astype(jnp.float32)
    o_ref[...] = y.astype(o_ref.dtype)


def _choose_block_rows(n_rows, n_chan, itemsize):
    """Pick a row tile so one pipeline buffer is ~_TARGET_BUFFER_BYTES.

    Accounts for the lane dim being padded to a multiple of 128 in VMEM when
    C < 128 (the worst case), and keeps the row tile a multiple of the packed
    sublane granularity (8 rows for f32, 16 for bf16, ...), so the BlockSpec
    satisfies the (8, 128) tiling rule on every generation.
    """
    padded_c = ((n_chan + _LANES - 1) // _LANES) * _LANES
    packing = max(1, 4 // itemsize)            # rows packed per 32-bit sublane
    row_align = _SUBLANES * packing
    tm = _TARGET_BUFFER_BYTES // (padded_c * itemsize)
    tm = max(row_align, (tm // row_align) * row_align)
    if tm >= n_rows:
        return n_rows                          # single block (full dim is legal)
    return tm


def _layernorm_lastdim_2d(x2d, w2d, block_rows):
    R, C = x2d.shape
    grid = (pl.cdiv(R, block_rows),)
    return pl.pallas_call(
        _biasfree_ln_kernel,
        out_shape=jax.ShapeDtypeStruct((R, C), x2d.dtype),
        grid_spec=pl.GridSpec(
            grid=grid,
            in_specs=[
                pl.BlockSpec((block_rows, C), lambda i: (i, 0)),
                pl.BlockSpec((1, C), lambda i: (0, 0)),     # weight stays resident
            ],
            out_specs=pl.BlockSpec((block_rows, C), lambda i: (i, 0)),
        ),
        compiler_params=pltpu.CompilerParams(
            dimension_semantics=("parallel",),              # lets v7x use both TCs
            vmem_limit_bytes=_VMEM_LIMIT_BYTES,
        ),
    )(x2d, w2d)


@functools.partial(jax.jit, static_argnames=("block_rows",))
def biasfree_layernorm(x, weight, *, block_rows=None):
    """Pallas equivalent of BiasFree_LayerNorm(C).forward(x) for x of shape (..., C)."""
    C = x.shape[-1]
    R = math.prod(x.shape[:-1]) if x.ndim > 1 else 1
    if block_rows is None:
        block_rows = _choose_block_rows(R, C, jnp.dtype(x.dtype).itemsize)
    x2d = x.reshape(R, C)                    # free, row-major metadata reshape
    w2d = weight.reshape(1, C)
    out2d = _layernorm_lastdim_2d(x2d, w2d, block_rows)
    return out2d.reshape(x.shape)


def _reference(x, weight):
    xf = x.astype(jnp.float32)
    mu = jnp.mean(xf, axis=-1, keepdims=True)
    var = jnp.mean((xf - mu) ** 2, axis=-1, keepdims=True)
    y = xf / jnp.sqrt(var + 1e-5) * weight.astype(jnp.float32)
    return y.astype(x.dtype)


if __name__ == "__main__":
    key = jax.random.PRNGKey(0)
    ok = True

    # (shape, block_rows override).  block_rows=None lets the wrapper pick a
    # large tile; the explicit 64 exercises a multi-step grid whose last block
    # is ragged (300 % 64 != 0), checking the no-pad / no-slice path.
    configs = [
        ((2, 8, 32), None),      # batch=2, seq=8, hidden=32
        ((1, 300, 48), 64),      # 5 grid steps, ragged last row-block
        ((2, 40, 192), None),    # channel dim wider than one vreg (192 lanes)
    ]

    for shape, br in configs:
        C = shape[-1]
        key, k1, k2 = jax.random.split(key, 3)
        x = jax.random.normal(k1, shape, dtype=jnp.float32)
        # Module initialises weight to ones; perturb it so the scale path is
        # genuinely exercised (as if trained).
        weight = jnp.ones((C,), jnp.float32) + 0.1 * jax.random.normal(
            k2, (C,), dtype=jnp.float32
        )

        out = biasfree_layernorm(x, weight, block_rows=br)
        out = jax.block_until_ready(out)
        ref = _reference(x, weight)
        if not jnp.allclose(out, ref, atol=1e-5, rtol=1e-5):
            ok = False

    if ok:
        print("KERNEL_OK")
</pallas_src>

<mosaic_0001>
module attributes {stable_mosaic.version = 11 : i64} {
  func.func @_biasfree_ln_kernel(%arg0: i32, %arg1: memref<16x32xf32, #tpu.memory_space<vmem>>, %arg2: memref<1x32xf32, #tpu.memory_space<vmem>>, %arg3: memref<16x32xf32, #tpu.memory_space<vmem>>) attributes {dimension_semantics = [#tpu.dimension_semantics<parallel>], iteration_bounds = array<i64: 1>, scalar_prefetch = 0 : i64, scratch_operands = 0 : i64, tpu.core_type = #tpu.core_type<tc>, window_params = [{transform_indices = @transform_0, window_bounds = array<i64: 16, 32>}, {pipeline_mode = #tpu.pipeline_mode<synchronous>, transform_indices = @transform_1, window_bounds = array<i64: 1, 32>}, {transform_indices = @transform_2, window_bounds = array<i64: 16, 32>}]} {
    %c0 = arith.constant 0 : index
    %c0_0 = arith.constant 0 : index
    %0 = vector.load %arg1[%c0, %c0_0] : memref<16x32xf32, #tpu.memory_space<vmem>>, vector<16x32xf32>
    %cst = arith.constant dense<0.000000e+00> : vector<16xf32>
    %1 = vector.multi_reduction <add>, %0, %cst [1] : vector<16x32xf32> to vector<16xf32>
    %2 = vector.shape_cast %1 : vector<16xf32> to vector<16x1xf32>
    %cst_1 = arith.constant 3.200000e+01 : f32
    %3 = vector.broadcast %cst_1 : f32 to vector<16x1xf32>
    %4 = arith.divf %2, %3 : vector<16x1xf32>
    %5 = vector.broadcast %4 : vector<16x1xf32> to vector<16x32xf32>
    %6 = arith.subf %0, %5 : vector<16x32xf32>
    %7 = arith.mulf %6, %6 : vector<16x32xf32>
    %cst_2 = arith.constant dense<0.000000e+00> : vector<16xf32>
    %8 = vector.multi_reduction <add>, %7, %cst_2 [1] : vector<16x32xf32> to vector<16xf32>
    %9 = vector.shape_cast %8 : vector<16xf32> to vector<16x1xf32>
    %cst_3 = arith.constant 3.200000e+01 : f32
    %10 = vector.broadcast %cst_3 : f32 to vector<16x1xf32>
    %11 = arith.divf %9, %10 : vector<16x1xf32>
    %cst_4 = arith.constant 9.99999974E-6 : f32
    %12 = vector.broadcast %cst_4 : f32 to vector<16x1xf32>
    %13 = arith.addf %11, %12 : vector<16x1xf32>
    %14 = math.rsqrt %13 : vector<16x1xf32>
    %15 = vector.broadcast %14 : vector<16x1xf32> to vector<16x32xf32>
    %16 = arith.mulf %0, %15 : vector<16x32xf32>
    %c0_5 = arith.constant 0 : index
    %c0_6 = arith.constant 0 : index
    %17 = vector.load %arg2[%c0_5, %c0_6] : memref<1x32xf32, #tpu.memory_space<vmem>>, vector<1x32xf32>
    %18 = vector.broadcast %17 : vector<1x32xf32> to vector<16x32xf32>
    %19 = arith.mulf %16, %18 : vector<16x32xf32>
    %c0_7 = arith.constant 0 : index
    %c0_8 = arith.constant 0 : index
    %20 = vector.load %arg3[%c0_7, %c0_8] : memref<16x32xf32, #tpu.memory_space<vmem>>, vector<16x32xf32>
    tpu.vector_store %arg3[%c0_7, %c0_8], %19 {strides = array<i32>} : memref<16x32xf32, #tpu.memory_space<vmem>>, vector<16x32xf32>,
    return
  }
  func.func @transform_0(%arg0: i32) -> (i32, i32) {
    %c0_i32 = arith.constant 0 : i32
    %c0_i32_0 = arith.constant 0 : i32
    return %arg0, %c0_i32 : i32, i32
  }
  func.func @transform_1(%arg0: i32) -> (i32, i32) {
    %c0_i32 = arith.constant 0 : i32
    %c0_i32_0 = arith.constant 0 : i32
    %c0_i32_1 = arith.constant 0 : i32
    return %c0_i32, %c0_i32_0 : i32, i32
  }
  func.func @transform_2(%arg0: i32) -> (i32, i32) {
    %c0_i32 = arith.constant 0 : i32
    %c0_i32_0 = arith.constant 0 : i32
    return %arg0, %c0_i32 : i32, i32
  }
}

</mosaic_0001>

<llo_original>
// kernel: biasfree_layernorm.1
$region0: #{biasfree_layernorm.1}
  #allocation0 [shape = 'u32[]', space=smem, size = 0x4, offset = 0x4, fixed_abs, tag = 'smem constant byte address 0x4 - core index']
  #allocation1 [shape = 'u32[144,128]{1,0:T(1,128)}', space=vmem, size = 0x12000, scoped, tag = 'internal scratch']
  %s0 = inlined_call_operand.hbm [shape: f32[16,32], index: 0, kind: input, shape index: {}]
  %s1 = inlined_call_operand.vmem [shape: f32[1,32], index: 1, kind: input, shape index: {}]
  %s2 = inlined_call_operand.hbm [shape: f32[16,32], index: 2, kind: output, shape index: {}]
  %s3 = sld [smem:[#allocation0]]
  $region22: #{biasfree_layernorm.1} parent=0
    _
  %s5 = ssub.s32 1, %s3
  %s6 = scalar_select 0, %s5, %s3
  $region1: #{biasfree_layernorm.1} parent=0
    #allocation2 [shape = 'u8[8192]{0}', space=vmem, size = 0x2000, scoped, tag = 'input window, operand 0, single buffered']
    #allocation3 [shape = 's32[1]{0}', space=sflag, size = 0x4, scoped, tag = 'scoped memory for biasfree_layernorm.1']
    #allocation4 [shape = 's32[1]{0}', space=sflag, size = 0x4, scoped, tag = 'scoped memory for biasfree_layernorm.1']
    #allocation5 [shape = 'u8[8192]{0}', space=vmem, size = 0x2000, scoped, tag = 'output window, operand 0, single buffered']
    %7 = vsyncpa [#allocation3], 0
    %8 = vsyncpa [#allocation4], 0
    // Predicated region
    $region2: #{biasfree_layernorm.1} parent=1 // pred_check
      _
    $region3: #{biasfree_layernorm.1} parent=1 // pred_check_branch
      %10 = sbr.rel (0) target = $region5
    $region4: #{biasfree_layernorm.1} parent=1 // pred_region
      %s12 = ssub.s32 256, 256
      %13 = vsyncadd [#allocation3], %s12
      %s14 = sshll.u32 [#allocation2], 4
      %s15 = int_to_ptr.vmem [resolvable:$true] %s14
      %20 = dma.hbm_to_vmem [thread:$0]  %s0, 256, %s15, [#allocation3], 128, 128, 8
    $region5: #{biasfree_layernorm.1} parent=1 // pred_fallthru
      _
    // Predicated region
    $region6: #{biasfree_layernorm.1} parent=1 // pred_check
      _
    $region7: #{biasfree_layernorm.1} parent=1 // pred_check_branch
      %22 = sbr.rel (0) target = $region9
    $region8: #{biasfree_layernorm.1} parent=1 // pred_region
      _
    $region9: #{biasfree_layernorm.1} parent=1 // pred_fallthru
      _
    // Predicated region
    $region10: #{biasfree_layernorm.1} parent=1 // pred_check
      _
    $region11: #{biasfree_layernorm.1} parent=1 // pred_check_branch
      %24 = sbr.rel (0) target = $region13
    $region12: #{biasfree_layernorm.1} parent=1 // pred_region
      %25 = dma.done [#allocation3], 256
    $region13: #{biasfree_layernorm.1} parent=1 // pred_fallthru
      _
    %v26 = vld [vmem:[#allocation2] sm:$0xff]
    %v27 = vld [vmem:[#allocation2 + $0x8] sm:$0xff]
    %vm28 = vcmask 261120
    %v29 = vsel %vm28, %v26, 0.0
    %30 = vadd.xlane.f32.xlu0 %v29
    %v31 = vpop.xlane.xlu0 %30
    %v32 = vsel %vm28, %v27, 0.0
    %33 = vadd.xlane.f32.xlu0 %v32
    %v34 = vpop.xlane.xlu0 %33
    %v35 = vrcp.pop 32.0
    %v36 = vmul.f32 %v31, %v35
    %v37 = vmul.f32 %v34, %v35
    %v38 = vsub.f32 %v26, %v36
    %v39 = vsub.f32 %v27, %v37
    %v40 = vmul.f32 %v38, %v38
    %v41 = vmul.f32 %v39, %v39
    %v42 = vsel %vm28, %v40, 0.0
    %43 = vadd.xlane.f32.xlu0 %v42
    %v44 = vpop.xlane.xlu0 %43
    %v45 = vsel %vm28, %v41, 0.0
    %46 = vadd.xlane.f32.xlu0 %v45
    %v47 = vpop.xlane.xlu0 %46
    %v48 = vmul.f32 %v44, %v35
    %v49 = vmul.f32 %v47, %v35
    %v50 = vadd.f32 %v48, 1e-05
    %v51 = vadd.f32 %v49, 1e-05
    %v52 = vrsqrt.pop %v50
    %v53 = vrsqrt.pop %v51
    %v54 = vmul.f32 %v26, %v52
    %v55 = vmul.f32 %v27, %v53
    %v56 = vld [vmem:[%s1] sm:$0x1]
    %v58 = vlaneseq
    %v59 = vshrl.u32 %v58, 7
    %v60 = vsub.s32 0, %v59
    %v61 = vrot.slane %v56, %v60
    %v63 = vmul.f32 %v54, %v61
    %v64 = vmul.f32 %v55, %v61
    %65 = vst.msk [vmem:[#allocation5] sm:$0xff] %vm28, %v63
    %66 = vst.msk [vmem:[#allocation5 + $0x8] sm:$0xff] %vm28, %v64
    // Predicated region
    $region14: #{biasfree_layernorm.1} parent=1 // pred_check
      _
    $region15: #{biasfree_layernorm.1} parent=1 // pred_check_branch
      %68 = sbr.rel (0) target = $region17
    $region16: #{biasfree_layernorm.1} parent=1 // pred_region
      %s70 = ssub.s32 256, 256
      %71 = vsyncadd [#allocation4], %s70
      %s72 = sshll.u32 [#allocation5], 4
      %s73 = int_to_ptr.vmem [resolvable:$true] %s72
      %78 = dma.vmem_to_hbm [thread:$0]  %s73, 256, %s2, [#allocation4], 128, 128, 8
    $region17: #{biasfree_layernorm.1} parent=1 // pred_fallthru
      _
    // Predicated region
    $region18: #{biasfree_layernorm.1} parent=1 // pred_check
      _
    $region19: #{biasfree_layernorm.1} parent=1 // pred_check_branch
      %80 = sbr.rel (0) target = $region21
    $region20: #{biasfree_layernorm.1} parent=1 // pred_region
      %81 = dma.done [#allocation4], 256
    $region21: #{biasfree_layernorm.1} parent=1 // pred_fallthru
      _
    %82 = vsyncpa [#allocation3], 1
    %83 = vsyncpa [#allocation4], 1

</llo_original>
